<compile_context>
chip_gen: v7x
topology: tpu7x:2x2x1
jax: 0.10.0
libtpu: 0.0.40
codegen_flags: <defaults>
</compile_context>

<pallas_src>
import functools

import jax
import jax.numpy as jnp
from jax import lax
from jax.experimental import pallas as pl
from jax.experimental.pallas import tpu as pltpu


_PACK_K_MAX_CIN = 32  # pack the 9 taps into the contraction dim when Cin <= this


# ----------------------------------------------------------------------------
# Pallas kernel: re-parameterised 3x3 conv + bias + ReLU on a flat strip
# ----------------------------------------------------------------------------
def _repvgg_kernel(x_ref, w_ref, b_ref, o_ref, *, offsets, L):
    # x_ref: (1, Lx, K)        flattened input strip (compute dtype)
    #        packed path:  Lx == L == H*W,       K == 9*Cin, offsets == (0,)
    #        strip  path:  Lx == (H+3)*(W+2),    K == Cin,   9 offsets
    # w_ref: (n_taps, K, TN)   fused weights (compute dtype)
    # b_ref: (1, TN)           fused bias (f32)
    # o_ref: (1, L, TN)        flat output tile (compute dtype)
    acc = jnp.dot(x_ref[0, offsets[0]:offsets[0] + L, :], w_ref[0],
                  preferred_element_type=jnp.float32)
    for k in range(1, len(offsets)):
        off = offsets[k]
        acc += jnp.dot(x_ref[0, off:off + L, :], w_ref[k],
                       preferred_element_type=jnp.float32)
    # Bias + ReLU in f32 on the flat accumulator, cast once, lane-dense store.
    o_ref[0] = jnp.maximum(acc + b_ref[...], 0.0).astype(o_ref.dtype)


# ----------------------------------------------------------------------------
# Wrapper: BN fusion + structural reparam (glue) + pallas_call
# ----------------------------------------------------------------------------
def _fuse_conv_bn(w_oihw, gamma, beta, rmean, rvar, eps=1e-5):
    """Fold eval-mode BN into conv weights. Returns HWIO weights and bias."""
    std = jnp.sqrt(rvar + eps)
    scale = gamma / std                                   # (Cout,)
    w_hwio = jnp.transpose(w_oihw, (2, 3, 1, 0))          # (kh, kw, Cin, Cout)
    return w_hwio * scale[None, None, None, :], beta - rmean * scale


def _round_up(x, m):
    return (x + m - 1) // m * m


def _pick_tile_and_vmem(Lx, L, K, n_taps, Coutp, compute_dtype):
    isz = jnp.dtype(compute_dtype).itemsize

    def est(t):
        in_blk = Lx * K * isz
        w_blk = n_taps * K * t * isz
        b_blk = t * 4
        out_blk = L * t * isz
        acc = L * t * 4
        return 2 * (in_blk + w_blk + b_blk + out_blk) + acc

    budget = 20 * 1024 * 1024
    tn = 128
    for t in (512, 384, 256, 128):
        if Coutp % t == 0 and est(t) <= budget:
            tn = t
            break
    vmem_limit = int(min(48 * 1024 * 1024, max(32 * 1024 * 1024, 2 * est(tn))))
    return tn, vmem_limit


def repvgg_block_forward(x_nchw, params, compute_dtype=jnp.bfloat16):
    """Forward pass of RepVGGBlock (deploy=False). x_nchw: (N, Cin, H, W)."""
    N, Cin, H, W = x_nchw.shape
    Cout = params["w3"].shape[0]
    has_identity = params["has_identity"]
    eps = 1e-5

    # ---- plain-JAX glue: BN fusion + full structural reparam (f32) ---------
    w3f, b3f = _fuse_conv_bn(params["w3"], params["g3"], params["be3"],
                             params["rm3"], params["rv3"], eps)   # (3,3,Cin,Cout)
    w1f, b1f = _fuse_conv_bn(params["w1"], params["g1"], params["be1"],
                             params["rm1"], params["rv1"], eps)   # (1,1,Cin,Cout)
    w_eq = w3f.at[1, 1].add(w1f[0, 0])
    b_eq = b3f + b1f
    if has_identity:
        sid = params["gi"] / jnp.sqrt(params["rvi"] + eps)        # (Cin,)
        w_eq = w_eq.at[1, 1].add(jnp.eye(Cin, dtype=w_eq.dtype) * sid[None, :])
        b_eq = b_eq + params["bei"] - params["rmi"] * sid

    # Lane-dense output channels: zero-pad Cout up to a multiple of 128.
    Coutp = _round_up(max(Cout, 128), 128)
    w_eq = jnp.pad(w_eq, ((0, 0), (0, 0), (0, 0), (0, Coutp - Cout)))
    b_eq = jnp.pad(b_eq, ((0, Coutp - Cout),)).reshape(1, Coutp).astype(jnp.float32)

    # ---- input layout (NCHW -> NHWC, cast, pad, flatten) --------------------
    x = jnp.transpose(x_nchw, (0, 2, 3, 1)).astype(compute_dtype)  # (N,H,W,Cin)
    pack_taps = Cin <= _PACK_K_MAX_CIN

    if pack_taps:
        # Small Cin: pack the 9 taps into the contraction dim (K = 9*Cin) so
        # the kernel issues ONE big-K MXU matmul instead of 9 tiny-K dots.
        xp = jnp.pad(x, ((0, 0), (1, 1), (1, 1), (0, 0)))           # (N,H+2,W+2,Cin)
        taps = [xp[:, dh:dh + H, dw:dw + W, :]
                for dh in range(3) for dw in range(3)]
        K = 9 * Cin
        x_in = jnp.concatenate(taps, axis=-1).reshape(N, H * W, K)
        Lx = L = H * W
        offsets = (0,)
        n_taps = 1
        w_k = w_eq.reshape(1, K, Coutp).astype(compute_dtype)
    else:
        # Large Cin: zero-pad (1 top / 2 bottom / 1 left+right) and flatten the
        # rows so every 3x3 tap is a CONTIGUOUS row slice of the strip.
        xp = jnp.pad(x, ((0, 0), (1, 2), (1, 1), (0, 0)))           # (N,H+3,W+2,Cin)
        K = Cin
        Lx = (H + 3) * (W + 2)
        x_in = xp.reshape(N, Lx, K)
        L = H * (W + 2)                     # two junk columns per row, cropped later
        offsets = tuple(dh * (W + 2) + dw for dh in range(3) for dw in range(3))
        n_taps = 9
        w_k = w_eq.reshape(9, K, Coutp).astype(compute_dtype)

    TN, vmem_limit = _pick_tile_and_vmem(Lx, L, K, n_taps, Coutp, compute_dtype)
    n_j = Coutp // TN

    kernel = functools.partial(_repvgg_kernel, offsets=offsets, L=L)
    out_itemsize = jnp.dtype(compute_dtype).itemsize
    cost = pl.CostEstimate(
        flops=2 * 9 * N * H * W * Cin * Coutp,
        transcendentals=0,
        bytes_accessed=int(x_in.size * x_in.dtype.itemsize
                           + w_k.size * w_k.dtype.itemsize
                           + b_eq.size * 4
                           + N * L * Coutp * out_itemsize))

    # Grid: Cout-tile axis OUTERMOST so fused weights are DMA'd from HBM only
    # once (n_j fetches total); the per-image strip changes every step and is
    # double-buffered by the pipeline. Both axes independent -> "parallel".
    out_flat = pl.pallas_call(
        kernel,
        out_shape=jax.ShapeDtypeStruct((N, L, Coutp), compute_dtype),
        grid_spec=pltpu.PrefetchScalarGridSpec(
            num_scalar_prefetch=0,
            grid=(n_j, N),
            in_specs=[
                pl.BlockSpec((1, Lx, K), lambda j, n: (n, 0, 0)),
                pl.BlockSpec((n_taps, K, TN), lambda j, n: (0, 0, j)),
                pl.BlockSpec((1, TN), lambda j, n: (0, j)),
            ],
            out_specs=pl.BlockSpec((1, L, TN), lambda j, n: (n, 0, j)),
        ),
        compiler_params=pltpu.CompilerParams(
            dimension_semantics=("parallel", "parallel"),
            vmem_limit_bytes=vmem_limit),
        cost_estimate=cost,
    )(x_in, w_k, b_eq)

    # Single fused output pass: crop junk columns (strip path), drop channel
    # padding, NHWC->NCHW, up-cast.
    if pack_taps:
        out = out_flat.reshape(N, H, W, Coutp)[..., :Cout]
    else:
        out = out_flat.reshape(N, H, W + 2, Coutp)[:, :, :W, :Cout]
    return jnp.transpose(out, (0, 3, 1, 2)).astype(x_nchw.dtype)


# ----------------------------------------------------------------------------
# Pure-JAX reference (unfused three-branch forward, eval-mode BN)
# ----------------------------------------------------------------------------
def repvgg_block_reference(x_nchw, params):
    eps = 1e-5

    def bn(y, gamma, beta, rmean, rvar):
        g = gamma.reshape(1, -1, 1, 1)
        b = beta.reshape(1, -1, 1, 1)
        m = rmean.reshape(1, -1, 1, 1)
        v = rvar.reshape(1, -1, 1, 1)
        return (y - m) / jnp.sqrt(v + eps) * g + b

    dn = ("NCHW", "OIHW", "NCHW")
    y3 = lax.conv_general_dilated(x_nchw, params["w3"], (1, 1),
                                  [(1, 1), (1, 1)], dimension_numbers=dn)
    y3 = bn(y3, params["g3"], params["be3"], params["rm3"], params["rv3"])
    y1 = lax.conv_general_dilated(x_nchw, params["w1"], (1, 1),
                                  [(0, 0), (0, 0)], dimension_numbers=dn)
    y1 = bn(y1, params["g1"], params["be1"], params["rm1"], params["rv1"])
    if params["has_identity"]:
        yid = bn(x_nchw, params["gi"], params["bei"],
                 params["rmi"], params["rvi"])
    else:
        yid = 0.0
    return jnp.maximum(y3 + y1 + yid, 0.0)


# ----------------------------------------------------------------------------
def make_params(key, in_channels, out_channels):
    ks = jax.random.split(key, 16)
    has_identity = (in_channels == out_channels)

    def uni(k, shape):
        return jax.random.uniform(k, shape, jnp.float32, 0.5, 1.5)

    return {
        "has_identity": has_identity,
        # 3x3 conv + BN
        "w3": 0.1 * jax.random.normal(ks[0], (out_channels, in_channels, 3, 3),
                                      jnp.float32),
        "g3": uni(ks[1], (out_channels,)),
        "be3": 0.1 * jax.random.normal(ks[2], (out_channels,), jnp.float32),
        "rm3": 0.1 * jax.random.normal(ks[3], (out_channels,), jnp.float32),
        "rv3": uni(ks[4], (out_channels,)),
        # 1x1 conv + BN
        "w1": 0.1 * jax.random.normal(ks[5], (out_channels, in_channels, 1, 1),
                                      jnp.float32),
        "g1": uni(ks[6], (out_channels,)),
        "be1": 0.1 * jax.random.normal(ks[7], (out_channels,), jnp.float32),
        "rm1": 0.1 * jax.random.normal(ks[8], (out_channels,), jnp.float32),
        "rv1": uni(ks[9], (out_channels,)),
        # identity BN
        "gi": uni(ks[10], (in_channels,)),
        "bei": 0.1 * jax.random.normal(ks[11], (in_channels,), jnp.float32),
        "rmi": 0.1 * jax.random.normal(ks[12], (in_channels,), jnp.float32),
        "rvi": uni(ks[13], (in_channels,)),
    }


if __name__ == "__main__":
    key = jax.random.PRNGKey(0)
    kx, kp, kx2, kp2, kx3, kp3 = jax.random.split(key, 6)

    # Case 1: in_channels == out_channels -> identity branch (packed-K path).
    N, C, H, W = 2, 4, 16, 16
    x = jax.random.normal(kx, (N, C, H, W), jnp.float32)
    params = make_params(kp, C, C)
    ref = repvgg_block_reference(x, params)

    out_f32 = jax.block_until_ready(
        repvgg_block_forward(x, params, compute_dtype=jnp.float32))
    assert out_f32.shape == ref.shape == (N, C, H, W)
    assert jnp.allclose(out_f32, ref, atol=1e-4, rtol=1e-4), (
        float(jnp.max(jnp.abs(out_f32 - ref))))

    # Default fast path: bf16 operands + bf16 output store, f32 accumulation.
    out_bf16 = jax.block_until_ready(repvgg_block_forward(x, params))
    assert jnp.allclose(out_bf16, ref, atol=5e-2, rtol=5e-2), (
        float(jnp.max(jnp.abs(out_bf16 - ref))))

    # Case 2: in_channels != out_channels -> no identity branch (packed path).
    x2 = jax.random.normal(kx2, (N, 4, H, W), jnp.float32)
    params2 = make_params(kp2, 4, 8)
    ref2 = repvgg_block_reference(x2, params2)
    out2 = jax.block_until_ready(
        repvgg_block_forward(x2, params2, compute_dtype=jnp.float32))
    assert out2.shape == ref2.shape == (N, 8, H, W)
    assert jnp.allclose(out2, ref2, atol=1e-4, rtol=1e-4), (
        float(jnp.max(jnp.abs(out2 - ref2))))

    # Case 3: Cin > 32 -> contiguous-strip 9-dot path.
    x3 = jax.random.normal(kx3, (2, 40, 8, 8), jnp.float32)
    params3 = make_params(kp3, 40, 24)
    ref3 = repvgg_block_reference(x3, params3)
    out3 = jax.block_until_ready(
        repvgg_block_forward(x3, params3, compute_dtype=jnp.float32))
    assert out3.shape == ref3.shape == (2, 24, 8, 8)
    assert jnp.allclose(out3, ref3, atol=2e-3, rtol=2e-3), (
        float(jnp.max(jnp.abs(out3 - ref3))))

    print("KERNEL_OK")
</pallas_src>

<mosaic_0001>
module attributes {stable_mosaic.version = 11 : i64} {
  func.func @_repvgg_kernel(%arg0: i32, %arg1: i32, %arg2: memref<1x256x36xf32, #tpu.memory_space<vmem>>, %arg3: memref<1x36x128xf32, #tpu.memory_space<vmem>>, %arg4: memref<1x128xf32, #tpu.memory_space<vmem>>, %arg5: memref<1x256x128xf32, #tpu.memory_space<vmem>>) attributes {dimension_semantics = [#tpu.dimension_semantics<parallel>, #tpu.dimension_semantics<parallel>], iteration_bounds = array<i64: 1, 2>, scalar_prefetch = 0 : i64, scratch_operands = 0 : i64, tpu.core_type = #tpu.core_type<tc>, window_params = [{transform_indices = @transform_0, window_bounds = array<i64: 1, 256, 36>}, {transform_indices = @transform_1, window_bounds = array<i64: 1, 36, 128>}, {transform_indices = @transform_2, window_bounds = array<i64: 1, 128>}, {transform_indices = @transform_3, window_bounds = array<i64: 1, 256, 128>}]} {
    %c0 = arith.constant 0 : index
    %c0_0 = arith.constant 0 : index
    %c0_1 = arith.constant 0 : index
    %0 = vector.load %arg2[%c0, %c0_0, %c0_1] : memref<1x256x36xf32, #tpu.memory_space<vmem>>, vector<1x256x36xf32>
    %1 = vector.shape_cast %0 : vector<1x256x36xf32> to vector<256x36xf32>
    %c0_2 = arith.constant 0 : index
    %c0_3 = arith.constant 0 : index
    %c0_4 = arith.constant 0 : index
    %2 = vector.load %arg3[%c0_2, %c0_3, %c0_4] : memref<1x36x128xf32, #tpu.memory_space<vmem>>, vector<1x36x128xf32>
    %3 = vector.shape_cast %2 : vector<1x36x128xf32> to vector<36x128xf32>
    %cst = arith.constant dense<0.000000e+00> : vector<256x128xf32>
    %4 = tpu.matmul %1, %3, %cst {dimension_numbers = #tpu.dot_dimension_numbers<[1], [0], [0], [1], [0, 0, 1, 1], [], []>} : vector<256x36xf32>, vector<36x128xf32>, vector<256x128xf32> -> vector<256x128xf32>
    %c0_5 = arith.constant 0 : index
    %c0_6 = arith.constant 0 : index
    %5 = vector.load %arg4[%c0_5, %c0_6] : memref<1x128xf32, #tpu.memory_space<vmem>>, vector<1x128xf32>
    %6 = vector.broadcast %5 : vector<1x128xf32> to vector<256x128xf32>
    %7 = arith.addf %4, %6 : vector<256x128xf32>
    %cst_7 = arith.constant 0.000000e+00 : f32
    %8 = vector.broadcast %cst_7 : f32 to vector<256x128xf32>
    %9 = arith.maximumf %7, %8 : vector<256x128xf32>
    %c0_8 = arith.constant 0 : index
    %c0_9 = arith.constant 0 : index
    %c0_10 = arith.constant 0 : index
    %10 = vector.load %arg5[%c0_8, %c0_9, %c0_10] : memref<1x256x128xf32, #tpu.memory_space<vmem>>, vector<1x256x128xf32>
    %11 = vector.shape_cast %10 : vector<1x256x128xf32> to vector<256x128xf32>
    %12 = vector.shape_cast %9 : vector<256x128xf32> to vector<1x256x128xf32>
    tpu.vector_store %arg5[%c0_8, %c0_9, %c0_10], %12 {strides = array<i32>} : memref<1x256x128xf32, #tpu.memory_space<vmem>>, vector<1x256x128xf32>,
    return
  }
  func.func @transform_0(%arg0: i32, %arg1: i32) -> (i32, i32, i32) {
    %c0_i32 = arith.constant 0 : i32
    %c0_i32_0 = arith.constant 0 : i32
    %c0_i32_1 = arith.constant 0 : i32
    return %arg1, %c0_i32, %c0_i32_0 : i32, i32, i32
  }
  func.func @transform_1(%arg0: i32, %arg1: i32) -> (i32, i32, i32) {
    %c0_i32 = arith.constant 0 : i32
    %c0_i32_0 = arith.constant 0 : i32
    %c0_i32_1 = arith.constant 0 : i32
    return %c0_i32, %c0_i32_0, %arg0 : i32, i32, i32
  }
  func.func @transform_2(%arg0: i32, %arg1: i32) -> (i32, i32) {
    %c0_i32 = arith.constant 0 : i32
    %c0_i32_0 = arith.constant 0 : i32
    return %c0_i32, %arg0 : i32, i32
  }
  func.func @transform_3(%arg0: i32, %arg1: i32) -> (i32, i32, i32) {
    %c0_i32 = arith.constant 0 : i32
    %c0_i32_0 = arith.constant 0 : i32
    return %arg1, %c0_i32, %arg0 : i32, i32, i32
  }
}

</mosaic_0001>

<llo_original>
// kernel: tpu_custom_call.1
$region0: #{tpu_custom_call.1}
  #allocation0 [shape = 'u32[]', space=smem, size = 0x4, offset = 0x4, fixed_abs, tag = 'smem constant byte address 0x4 - core index']
  #allocation1 [shape = 'u32[144,128]{1,0:T(1,128)}', space=vmem, size = 0x12000, scoped, tag = 'internal scratch']
  %s0 = inlined_call_operand.vmem [shape: f32[2,256,36], index: 0, kind: input, shape index: {}]
  %s1 = inlined_call_operand.vmem [shape: f32[1,36,128], index: 1, kind: input, shape index: {}]
  %s2 = inlined_call_operand.vmem [shape: f32[1,128], index: 2, kind: input, shape index: {}]
  %s3 = inlined_call_operand.hbm [shape: f32[2,256,128], index: 3, kind: output, shape index: {}]
  %s4 = sld [smem:[#allocation0]]
  $region45: #{tpu_custom_call.1} parent=0
    _
  %s6 = ssub.s32 1, %s4
  %s7 = scalar_select 0, %s6, %s4
  $region1: #{tpu_custom_call.1} parent=0
    #allocation2 [shape = 'u8[262144]{0}', space=vmem, size = 0x40000, scoped, tag = 'output window, operand 0']
    #allocation3 [shape = 's32[2]{0}', space=sflag, size = 0x8, scoped, tag = 'scoped memory for tpu_custom_call.1']
    %8 = vsyncpa [#allocation3], 0
    %s9 = scalar_lea.sflag [#allocation3], 1
    %10 = vsyncpa %s9, 0
    loop: start=0, step=1, limit=4
    $region2: #{tpu_custom_call.1} parent=1 // loop_pre_header
      _
    $region3: #{tpu_custom_call.1} parent=1 // loop_header
      %s12 = sphi 0, %s16
      %p13 = scmp.ge.s32.totalorder %s12, 4
      %s19 = sphi 0, %s31
      %s20 = sphi 0, %s27
      %s21 = sphi 0, %s19
      %s22 = sphi 0, %s20
      %s23 = sphi 0, %s21
      %s24 = sphi 0, %s22
      %s34 = sphi 0, %s36
      %s37 = sphi 0, %s34
      %s38 = sphi 0, %s37
      %s54 = sphi 0, %s38
      %s60 = sphi 0, %s62
      %s63 = sphi 0, %s60
      %s64 = sphi 0, %s63
      %s80 = sphi 0, %s64
      %s86 = sphi 0, %s88
      %s89 = sphi 0, %s86
      %s90 = sphi 0, %s89
      %s106 = sphi 0, %s90
      %s114 = sphi 0, %s116
      %s117 = sphi 0, %s114
      %s118 = sphi 0, %s117
      %s134 = sphi 0, %s118
    $region4: #{tpu_custom_call.1} parent=1 // loop_header_branch
      %15 = sbr.rel (%p13) target = $region8
    $region5: #{tpu_custom_call.1} parent=1 // loop_body
      %s17 = ssub.s32 %s12, 1
      %s18 = ssub.s32 %s12, 2
      %s25 = sadd.s32 1, %s20
      %p26 = scmp.ge.s32.totalorder %s25, 2
      %s27 = scalar_select %p26, 0, %s25
      %s28 = sadd.s32 1, %s19
      %s29 = scalar_select %p26, %s28, %s19
      %p30 = scmp.ge.s32.totalorder %s29, 1
      %s31 = scalar_select %p30, 0, %s29
      %s32 = ssub.s32 %s20, %s27
      %p33 = scmp.eq.s32.totalorder %s32, 0
      %s35 = sadd.s32 %s34, 1
      %s36 = scalar_select %p33, %s34, %s35
      %p39 = pneg %p33
      %p40 = scmp.eq.s32.totalorder %s12, 1
      %p41 = por %p39, %p40
      %p42 = scmp.ne.s32.totalorder %s34, %s37
      %p43 = scmp.eq.s32.totalorder %s12, 0
      %p44 = por %p42, %p43
      %p45 = scmp.ne.s32.totalorder %s34, %s37
      %p46 = scmp.eq.s32.totalorder %s17, 1
      %p47 = por %p45, %p46
      %p48 = scmp.ne.s32.totalorder %s37, %s38
      %p49 = scmp.eq.s32.totalorder %s17, 0
      %p50 = por %p48, %p49
      %p51 = scmp.ne.s32.totalorder %s37, %s38
      %p52 = scmp.eq.s32.totalorder %s18, 1
      %p53 = por %p51, %p52
      %p55 = scmp.ne.s32.totalorder %s38, %s54
      %p56 = scmp.eq.s32.totalorder %s18, 0
      %p57 = por %p55, %p56
      %s58 = ssub.s32 %s19, %s31
      %p59 = scmp.eq.s32.totalorder %s58, 0
      %s61 = sadd.s32 %s60, 1
      %s62 = scalar_select %p59, %s60, %s61
      %p65 = pneg %p59
      %p66 = scmp.eq.s32.totalorder %s12, 1
      %p67 = por %p65, %p66
      %p68 = scmp.ne.s32.totalorder %s60, %s63
      %p69 = scmp.eq.s32.totalorder %s12, 0
      %p70 = por %p68, %p69
      %p71 = scmp.ne.s32.totalorder %s60, %s63
      %p72 = scmp.eq.s32.totalorder %s17, 1
      %p73 = por %p71, %p72
      %p74 = scmp.ne.s32.totalorder %s63, %s64
      %p75 = scmp.eq.s32.totalorder %s17, 0
      %p76 = por %p74, %p75
      %p77 = scmp.ne.s32.totalorder %s63, %s64
      %p78 = scmp.eq.s32.totalorder %s18, 1
      %p79 = por %p77, %p78
      %p81 = scmp.ne.s32.totalorder %s64, %s80
      %p82 = scmp.eq.s32.totalorder %s18, 0
      %p83 = por %p81, %p82
      %s84 = ssub.s32 %s19, %s31
      %p85 = scmp.eq.s32.totalorder %s84, 0
      %s87 = sadd.s32 %s86, 1
      %s88 = scalar_select %p85, %s86, %s87
      %p91 = pneg %p85
      %p92 = scmp.eq.s32.totalorder %s12, 1
      %p93 = por %p91, %p92
      %p94 = scmp.ne.s32.totalorder %s86, %s89
      %p95 = scmp.eq.s32.totalorder %s12, 0
      %p96 = por %p94, %p95
      %p97 = scmp.ne.s32.totalorder %s86, %s89
      %p98 = scmp.eq.s32.totalorder %s17, 1
      %p99 = por %p97, %p98
      %p100 = scmp.ne.s32.totalorder %s89, %s90
      %p101 = scmp.eq.s32.totalorder %s17, 0
      %p102 = por %p100, %p101
      %p103 = scmp.ne.s32.totalorder %s89, %s90
      %p104 = scmp.eq.s32.totalorder %s18, 1
      %p105 = por %p103, %p104
      %p107 = scmp.ne.s32.totalorder %s90, %s106
      %p108 = scmp.eq.s32.totalorder %s18, 0
      %p109 = por %p107, %p108
      %s110 = ssub.s32 %s20, %s27
      %s111 = ssub.s32 %s19, %s31
      %s112 = sor.u32 %s110, %s111
      %p113 = scmp.eq.s32.totalorder %s112, 0
      %s115 = sadd.s32 %s114, 1
      %s116 = scalar_select %p113, %s114, %s115
      %p119 = pneg %p113
      %p120 = scmp.eq.s32.totalorder %s12, 1
      %p121 = por %p119, %p120
      %p122 = scmp.ne.s32.totalorder %s114, %s117
      %p123 = scmp.eq.s32.totalorder %s12, 0
      %p124 = por %p122, %p123
      %p125 = scmp.ne.s32.totalorder %s114, %s117
      %p126 = scmp.eq.s32.totalorder %s17, 1
      %p127 = por %p125, %p126
      %p128 = scmp.ne.s32.totalorder %s117, %s118
      %p129 = scmp.eq.s32.totalorder %s17, 0
      %p130 = por %p128, %p129
      %p131 = scmp.ne.s32.totalorder %s117, %s118
      %p132 = scmp.eq.s32.totalorder %s18, 1
      %p133 = por %p131, %p132
      %p135 = scmp.ne.s32.totalorder %s118, %s134
      %p136 = scmp.eq.s32.totalorder %s18, 0
      %p137 = por %p135, %p136
      %p138 = scmp.le.s32.totalorder 1, %s12
      %p139 = scmp.lt.s32.totalorder %s12, 3
      %p140 = pnand %p138, %p139
      %p141 = pneg %p140
      // Predicated region
      $region9: #{tpu_custom_call.1} parent=5 // pred_check
        _
      $region10: #{tpu_custom_call.1} parent=5 // pred_check_branch
        %143 = sbr.rel (%p140) target = $region12
      $region11: #{tpu_custom_call.1} parent=5 // pred_region
        %s144 = ssub.s32 %s12, 1
        // Predicated region
        $region13: #{tpu_custom_call.1} parent=11 // pred_check
          %p145 = pneg %p76
        $region14: #{tpu_custom_call.1} parent=11 // pred_check_branch
          %147 = sbr.rel (%p145) target = $region16
        $region15: #{tpu_custom_call.1} parent=11 // pred_region
          %p148 = scmp.lt.s32.totalorder %s21, 0
          %s149 = scalar_select %p148, %s21, 0
          %s150 = smul.addr %s149, 8
          %s151 = scalar_lea.vmem %s1, %s150
        $region16: #{tpu_custom_call.1} parent=11 // pred_fallthru
          _
        // Predicated region
        $region17: #{tpu_custom_call.1} parent=11 // pred_check
          %p152 = pneg %p102
        $region18: #{tpu_custom_call.1} parent=11 // pred_check_branch
          %154 = sbr.rel (%p152) target = $region20
        $region19: #{tpu_custom_call.1} parent=11 // pred_region
          %p155 = scmp.lt.s32.totalorder %s21, 0
          %s156 = scalar_select %p155, %s21, 0
          %s157 = scalar_lea.vmem %s2, %s156
        $region20: #{tpu_custom_call.1} parent=11 // pred_fallthru
          _
      $region12: #{tpu_custom_call.1} parent=5 // pred_fallthru
        _
      %p158 = scmp.lt.s32.totalorder %s12, 2
      // Predicated region
      $region21: #{tpu_custom_call.1} parent=5 // pred_check
        %p159 = pneg %p158
      $region22: #{tpu_custom_call.1} parent=5 // pred_check_branch
        %161 = sbr.rel (%p159) target = $region24
      $region23: #{tpu_custom_call.1} parent=5 // pred_region
        // Predicated region
        $region25: #{tpu_custom_call.1} parent=23 // pred_check
          %p162 = pneg %p44
        $region26: #{tpu_custom_call.1} parent=23 // pred_check_branch
          %164 = sbr.rel (%p162) target = $region28
        $region27: #{tpu_custom_call.1} parent=23 // pred_region
          %p165 = scmp.lt.s32.totalorder %s20, 1
          %s166 = scalar_select %p165, %s20, 1
          %s167 = smul.addr %s166, 32
          %s168 = smul.addr %s167, 8
          %s169 = scalar_lea.vmem %s0, %s168
        $region28: #{tpu_custom_call.1} parent=23 // pred_fallthru
          _
      $region24: #{tpu_custom_call.1} parent=5 // pred_fallthru
        _
      %p170 = scmp.le.s32.totalorder 1, %s12
      %p171 = scmp.lt.s32.totalorder %s12, 3
      %p172 = pnand %p170, %p171
      %p173 = pneg %p172
      // Predicated region
      $region29: #{tpu_custom_call.1} parent=5 // pred_check
        _
      $region30: #{tpu_custom_call.1} parent=5 // pred_check_branch
        %175 = sbr.rel (%p172) target = $region32
      $region31: #{tpu_custom_call.1} parent=5 // pred_region
        %s176 = ssub.s32 %s12, 1
        %p177 = scmp.lt.s32.totalorder %s22, 1
        %s178 = scalar_select %p177, %s22, 1
        %s179 = smul.addr %s178, 32
        %s180 = smul.addr %s179, 8
        %s181 = scalar_lea.vmem %s0, %s180
        %p182 = pneg %p50
        %p183 = pneg %p47
        %p184 = scmp.lt.s32.totalorder %s21, 0
        %s185 = scalar_select %p184, %s21, 0
        %s186 = smul.addr %s185, 8
        %s187 = scalar_lea.vmem %s1, %s186
        %p188 = pneg %p76
        %p189 = pneg %p73
        %p190 = scmp.lt.s32.totalorder %s21, 0
        %s191 = scalar_select %p190, %s21, 0
        %s192 = scalar_lea.vmem %s2, %s191
        %p193 = pneg %p102
        %p194 = pneg %p99
        %p195 = pneg %p130
        %p196 = pneg %p127
        %s197 = sand.u32 %s117, 1
        %s198 = scalar_lea.sflag [#allocation3], %s197
        %s199 = sand.u32 %s117, 1
        %s200 = smul.addr %s199, 256
        %s201 = scalar_lea.vmem [#allocation2], %s200
        %p202 = scmp.lt.s32.totalorder %s22, 1
        %s203 = scalar_select %p202, %s22, 1
        %s204 = smul.addr %s203, 32
        %s205 = smul.addr %s204, 8
        %s206 = scalar_lea.vmem %s0, %s205
        %p207 = scmp.lt.s32.totalorder %s21, 0
        %s208 = scalar_select %p207, %s21, 0
        %s209 = smul.addr %s208, 8
        %s210 = scalar_lea.vmem %s1, %s209
        %p211 = scmp.lt.s32.totalorder %s21, 0
        %s212 = scalar_select %p211, %s21, 0
        %s213 = scalar_lea.vmem %s2, %s212
        %v214 = vld [vmem:[%s206] sm:$0xff]
        %v215 = vld [vmem:[%s206 + $0x8] sm:$0xff]
        %v216 = vld [vmem:[%s206 + $0x10] sm:$0xff]
        %v217 = vld [vmem:[%s206 + $0x18] sm:$0xff]
        %v218 = vld [vmem:[%s206 + $0x20] sm:$0xff]
        %v219 = vld [vmem:[%s206 + $0x28] sm:$0xff]
        %v220 = vld [vmem:[%s206 + $0x30] sm:$0xff]
        %v221 = vld [vmem:[%s206 + $0x38] sm:$0xff]
        %v222 = vld [vmem:[%s206 + $0x40] sm:$0xff]
        %v223 = vld [vmem:[%s206 + $0x48] sm:$0xff]
        %v224 = vld [vmem:[%s206 + $0x50] sm:$0xff]
        %v225 = vld [vmem:[%s206 + $0x58] sm:$0xff]
        %v226 = vld [vmem:[%s206 + $0x60] sm:$0xff]
        %v227 = vld [vmem:[%s206 + $0x68] sm:$0xff]
        %v228 = vld [vmem:[%s206 + $0x70] sm:$0xff]
        %v229 = vld [vmem:[%s206 + $0x78] sm:$0xff]
        %v230 = vld [vmem:[%s206 + $0x80] sm:$0xff]
        %v231 = vld [vmem:[%s206 + $0x88] sm:$0xff]
        %v232 = vld [vmem:[%s206 + $0x90] sm:$0xff]
        %v233 = vld [vmem:[%s206 + $0x98] sm:$0xff]
        %v234 = vld [vmem:[%s206 + $0xa0] sm:$0xff]
        %v235 = vld [vmem:[%s206 + $0xa8] sm:$0xff]
        %v236 = vld [vmem:[%s206 + $0xb0] sm:$0xff]
        %v237 = vld [vmem:[%s206 + $0xb8] sm:$0xff]
        %v238 = vld [vmem:[%s206 + $0xc0] sm:$0xff]
        %v239 = vld [vmem:[%s206 + $0xc8] sm:$0xff]
        %v240 = vld [vmem:[%s206 + $0xd0] sm:$0xff]
        %v241 = vld [vmem:[%s206 + $0xd8] sm:$0xff]
        %v242 = vld [vmem:[%s206 + $0xe0] sm:$0xff]
        %v243 = vld [vmem:[%s206 + $0xe8] sm:$0xff]
        %v244 = vld [vmem:[%s206 + $0xf0] sm:$0xff]
        %v245 = vld [vmem:[%s206 + $0xf8] sm:$0xff]
        %v246 = vld [vmem:[%s210] sm:$0xff]
        %v247 = vld [vmem:[%s210 + $0x8] sm:$0xff]
        %v248 = vld [vmem:[%s210 + $0x10] sm:$0xff]
        %v249 = vld [vmem:[%s210 + $0x18] sm:$0xff]
        %v250 = vld [vmem:[%s210 + $0x20] sm:$0xf]
        %v251 = vld [vmem:[%s213] sm:$0x1]
        %v253 = vlaneseq
        %v254 = vshrl.u32 %v253, 7
        %v255 = vsub.s32 0, %v254
        %v256 = vrot.slane %v251, %v255
        %vm258 = vcmask 293888
        %v260 = vsel %vm258, %v214, 0
        %v263 = vsel %vm258, %v215, 0
        %v266 = vsel %vm258, %v216, 0
        %v269 = vsel %vm258, %v217, 0
        %v272 = vsel %vm258, %v218, 0
        %v275 = vsel %vm258, %v219, 0
        %v278 = vsel %vm258, %v220, 0
        %v281 = vsel %vm258, %v221, 0
        %v284 = vsel %vm258, %v222, 0
        %v287 = vsel %vm258, %v223, 0
        %v290 = vsel %vm258, %v224, 0
        %v293 = vsel %vm258, %v225, 0
        %v296 = vsel %vm258, %v226, 0
        %v299 = vsel %vm258, %v227, 0
        %v302 = vsel %vm258, %v228, 0
        %v305 = vsel %vm258, %v229, 0
        %v308 = vsel %vm258, %v230, 0
        %v311 = vsel %vm258, %v231, 0
        %v314 = vsel %vm258, %v232, 0
        %v317 = vsel %vm258, %v233, 0
        %v320 = vsel %vm258, %v234, 0
        %v323 = vsel %vm258, %v235, 0
        %v326 = vsel %vm258, %v236, 0
        %v329 = vsel %vm258, %v237, 0
        %v332 = vsel %vm258, %v238, 0
        %v335 = vsel %vm258, %v239, 0
        %v338 = vsel %vm258, %v240, 0
        %v341 = vsel %vm258, %v241, 0
        %v344 = vsel %vm258, %v242, 0
        %v347 = vsel %vm258, %v243, 0
        %v350 = vsel %vm258, %v244, 0
        %v353 = vsel %vm258, %v245, 0
        %vm355 = vcmask 1043456
        %v357 = vsel %vm355, %v250, 0
        %359 = vmatprep.subr.mxu0 0.0
        %360 = vmatpush1.msra.mxu0 %v246
        %361 = vmatprep.subr.mxu0 0.0
        %362 = vmatpush1.msra.mxu0 %v247
        %363 = vmatprep.subr.mxu0 0.0
        %364 = vmatpush1.msra.mxu0 %v248
        %365 = vmatprep.subr.mxu0 0.0
        %366 = vmatpush1.msra.mxu0 %v249
        %367 = vmatprep.subr.mxu0 0.0
        %368 = vmatpush1.msra.mxu0 %v357
        %369 = vmatprep.subr.mxu0 0.0
        %370 = vmatpush1.msra.mxu0 0.0
        %371 = vmatprep.subr.mxu0 0.0
        %372 = vmatpush1.msra.mxu0 0.0
        %373 = vmatprep.subr.mxu0 0.0
        %374 = vmatpush1.msra.mxu0 0.0
        %375 = vmatprep.subr.mxu0 0.0
        %376 = vmatpush1.msra.mxu0 0.0
        %377 = vmatprep.subr.mxu0 0.0
        %378 = vmatpush1.msra.mxu0 0.0
        %379 = vmatprep.subr.mxu0 0.0
        %380 = vmatpush1.msra.mxu0 0.0
        %381 = vmatprep.subr.mxu0 0.0
        %382 = vmatpush1.msra.mxu0 0.0
        %383 = vmatprep.subr.mxu0 0.0
        %384 = vmatpush1.msra.mxu0 0.0
        %385 = vmatprep.subr.mxu0 0.0
        %386 = vmatpush1.msra.mxu0 0.0
        %387 = vmatprep.subr.mxu0 0.0
        %388 = vmatpush1.msra.mxu0 0.0
        %389 = vmatprep.subr.mxu0 0.0
        %390 = vmatpush1.msra.mxu0 0.0
        %391 = vmatprep.subr.mxu0 0.0
        %392 = vmatpush1.msra.mxu0 0.0
        %393 = vmatprep.subr.mxu0 0.0
        %394 = vmatpush1.msra.mxu0 0.0
        %395 = vmatprep.subr.mxu0 0.0
        %396 = vmatpush1.msra.mxu0 0.0
        %397 = vmatprep.subr.mxu0 0.0
        %398 = vmatpush1.msra.mxu0 0.0
        %399 = vmatprep.subr.mxu0 0.0
        %400 = vmatpush1.msra.mxu0 0.0
        %401 = vmatprep.subr.mxu0 0.0
        %402 = vmatpush1.msra.mxu0 0.0
        %403 = vmatprep.subr.mxu0 0.0
        %404 = vmatpush1.msra.mxu0 0.0
        %405 = vmatprep.subr.mxu0 0.0
        %406 = vmatpush1.msra.mxu0 0.0
        %407 = vmatprep.subr.mxu0 0.0
        %408 = vmatpush1.msra.mxu0 0.0
        %409 = vmatprep.subr.mxu0 0.0
        %410 = vmatpush1.msra.mxu0 0.0
        %411 = vmatprep.subr.mxu0 0.0
        %412 = vmatpush1.msra.mxu0 0.0
        %413 = vmatprep.subr.mxu0 0.0
        %414 = vmatpush1.msra.mxu0 0.0
        %415 = vmatprep.subr.mxu0 0.0
        %416 = vmatpush1.msra.mxu0 0.0
        %417 = vmatprep.subr.mxu0 0.0
        %418 = vmatpush1.msra.mxu0 0.0
        %419 = vmatprep.subr.mxu0 0.0
        %420 = vmatpush1.msra.mxu0 0.0
        %421 = vmatprep.subr.mxu0 0.0
        %422 = vmatpush1.msra.mxu0 0.0
        %423 = vmatprep.mubr.f32.mxu0 0.0
        %424 = vmatmul.mubr.f32.gmra.mrb[0].mxu0 %v260
        %v425 = vpop.f32.mrb[0].mxu0
        %v426 = vadd.f32 %v256, %v425
        %v427 = vpop.f32.mrb[0].mxu0
        %428 = vmatprep.mubr.f32.mxu0 0.0
        %429 = vmatmul.mubr.f32.gmra.mrb[0].mxu0 %v263
        %v430 = vpop.f32.mrb[0].mxu0
        %v431 = vadd.f32 %v256, %v430
        %v432 = vpop.f32.mrb[0].mxu0
        %433 = vmatprep.mubr.f32.mxu0 0.0
        %434 = vmatmul.mubr.f32.gmra.mrb[0].mxu0 %v266
        %v435 = vpop.f32.mrb[0].mxu0
        %v436 = vadd.f32 %v256, %v435
        %v437 = vpop.f32.mrb[0].mxu0
        %438 = vmatprep.mubr.f32.mxu0 0.0
        %439 = vmatmul.mubr.f32.gmra.mrb[0].mxu0 %v269
        %v440 = vpop.f32.mrb[0].mxu0
        %v441 = vadd.f32 %v256, %v440
        %v442 = vpop.f32.mrb[0].mxu0
        %443 = vmatprep.mubr.f32.mxu0 0.0
        %444 = vmatmul.mubr.f32.gmra.mrb[0].mxu0 %v272
        %v445 = vpop.f32.mrb[0].mxu0
        %v446 = vadd.f32 %v256, %v445
        %v447 = vpop.f32.mrb[0].mxu0
        %448 = vmatprep.mubr.f32.mxu0 0.0
        %449 = vmatmul.mubr.f32.gmra.mrb[0].mxu0 %v275
        %v450 = vpop.f32.mrb[0].mxu0
        %v451 = vadd.f32 %v256, %v450
        %v452 = vpop.f32.mrb[0].mxu0
        %453 = vmatprep.mubr.f32.mxu0 0.0
        %454 = vmatmul.mubr.f32.gmra.mrb[0].mxu0 %v278
        %v455 = vpop.f32.mrb[0].mxu0
        %v456 = vadd.f32 %v256, %v455
        %v457 = vpop.f32.mrb[0].mxu0
        %458 = vmatprep.mubr.f32.mxu0 0.0
        %459 = vmatmul.mubr.f32.gmra.mrb[0].mxu0 %v281
        %v460 = vpop.f32.mrb[0].mxu0
        %v461 = vadd.f32 %v256, %v460
        %v462 = vpop.f32.mrb[0].mxu0
        %463 = vmatprep.mubr.f32.mxu0 0.0
        %464 = vmatmul.mubr.f32.gmra.mrb[0].mxu0 %v284
        %v465 = vpop.f32.mrb[0].mxu0
        %v466 = vadd.f32 %v256, %v465
        %v467 = vpop.f32.mrb[0].mxu0
        %468 = vmatprep.mubr.f32.mxu0 0.0
        %469 = vmatmul.mubr.f32.gmra.mrb[0].mxu0 %v287
        %v470 = vpop.f32.mrb[0].mxu0
        %v471 = vadd.f32 %v256, %v470
        %v472 = vpop.f32.mrb[0].mxu0
        %473 = vmatprep.mubr.f32.mxu0 0.0
        %474 = vmatmul.mubr.f32.gmra.mrb[0].mxu0 %v290
        %v475 = vpop.f32.mrb[0].mxu0
        %v476 = vadd.f32 %v256, %v475
        %v477 = vpop.f32.mrb[0].mxu0
        %478 = vmatprep.mubr.f32.mxu0 0.0
        %479 = vmatmul.mubr.f32.gmra.mrb[0].mxu0 %v293
        %v480 = vpop.f32.mrb[0].mxu0
        %v481 = vadd.f32 %v256, %v480
        %v482 = vpop.f32.mrb[0].mxu0
        %483 = vmatprep.mubr.f32.mxu0 0.0
        %484 = vmatmul.mubr.f32.gmra.mrb[0].mxu0 %v296
        %v485 = vpop.f32.mrb[0].mxu0
        %v486 = vadd.f32 %v256, %v485
        %v487 = vpop.f32.mrb[0].mxu0
        %488 = vmatprep.mubr.f32.mxu0 0.0
        %489 = vmatmul.mubr.f32.gmra.mrb[0].mxu0 %v299
        %v490 = vpop.f32.mrb[0].mxu0
        %v491 = vadd.f32 %v256, %v490
        %v492 = vpop.f32.mrb[0].mxu0
        %493 = vmatprep.mubr.f32.mxu0 0.0
        %494 = vmatmul.mubr.f32.gmra.mrb[0].mxu0 %v302
        %v495 = vpop.f32.mrb[0].mxu0
        %v496 = vadd.f32 %v256, %v495
        %v497 = vpop.f32.mrb[0].mxu0
        %498 = vmatprep.mubr.f32.mxu0 0.0
        %499 = vmatmul.mubr.f32.gmra.mrb[0].mxu0 %v305
        %v500 = vpop.f32.mrb[0].mxu0
        %v501 = vadd.f32 %v256, %v500
        %v502 = vpop.f32.mrb[0].mxu0
        %503 = vmatprep.mubr.f32.mxu0 0.0
        %504 = vmatmul.mubr.f32.gmra.mrb[0].mxu0 %v308
        %v505 = vpop.f32.mrb[0].mxu0
        %v506 = vadd.f32 %v256, %v505
        %v507 = vpop.f32.mrb[0].mxu0
        %508 = vmatprep.mubr.f32.mxu0 0.0
        %509 = vmatmul.mubr.f32.gmra.mrb[0].mxu0 %v311
        %v510 = vpop.f32.mrb[0].mxu0
        %v511 = vadd.f32 %v256, %v510
        %v512 = vpop.f32.mrb[0].mxu0
        %513 = vmatprep.mubr.f32.mxu0 0.0
        %514 = vmatmul.mubr.f32.gmra.mrb[0].mxu0 %v314
        %v515 = vpop.f32.mrb[0].mxu0
        %v516 = vadd.f32 %v256, %v515
        %v517 = vpop.f32.mrb[0].mxu0
        %518 = vmatprep.mubr.f32.mxu0 0.0
        %519 = vmatmul.mubr.f32.gmra.mrb[0].mxu0 %v317
        %v520 = vpop.f32.mrb[0].mxu0
        %v521 = vadd.f32 %v256, %v520
        %v522 = vpop.f32.mrb[0].mxu0
        %523 = vmatprep.mubr.f32.mxu0 0.0
        %524 = vmatmul.mubr.f32.gmra.mrb[0].mxu0 %v320
        %v525 = vpop.f32.mrb[0].mxu0
        %v526 = vadd.f32 %v256, %v525
        %v527 = vpop.f32.mrb[0].mxu0
        %528 = vmatprep.mubr.f32.mxu0 0.0
        %529 = vmatmul.mubr.f32.gmra.mrb[0].mxu0 %v323
        %v530 = vpop.f32.mrb[0].mxu0
        %v531 = vadd.f32 %v256, %v530
        %v532 = vpop.f32.mrb[0].mxu0
        %533 = vmatprep.mubr.f32.mxu0 0.0
        %534 = vmatmul.mubr.f32.gmra.mrb[0].mxu0 %v326
        %v535 = vpop.f32.mrb[0].mxu0
        %v536 = vadd.f32 %v256, %v535
        %v537 = vpop.f32.mrb[0].mxu0
        %538 = vmatprep.mubr.f32.mxu0 0.0
        %539 = vmatmul.mubr.f32.gmra.mrb[0].mxu0 %v329
        %v540 = vpop.f32.mrb[0].mxu0
        %v541 = vadd.f32 %v256, %v540
        %v542 = vpop.f32.mrb[0].mxu0
        %543 = vmatprep.mubr.f32.mxu0 0.0
        %544 = vmatmul.mubr.f32.gmra.mrb[0].mxu0 %v332
        %v545 = vpop.f32.mrb[0].mxu0
        %v546 = vadd.f32 %v256, %v545
        %v547 = vpop.f32.mrb[0].mxu0
        %548 = vmatprep.mubr.f32.mxu0 0.0
        %549 = vmatmul.mubr.f32.gmra.mrb[0].mxu0 %v335
        %v550 = vpop.f32.mrb[0].mxu0
        %v551 = vadd.f32 %v256, %v550
        %v552 = vpop.f32.mrb[0].mxu0
        %553 = vmatprep.mubr.f32.mxu0 0.0
        %554 = vmatmul.mubr.f32.gmra.mrb[0].mxu0 %v338
        %v555 = vpop.f32.mrb[0].mxu0
        %v556 = vadd.f32 %v256, %v555
        %v557 = vpop.f32.mrb[0].mxu0
        %558 = vmatprep.mubr.f32.mxu0 0.0
        %559 = vmatmul.mubr.f32.gmra.mrb[0].mxu0 %v341
        %v560 = vpop.f32.mrb[0].mxu0
        %v561 = vadd.f32 %v256, %v560
        %v562 = vpop.f32.mrb[0].mxu0
        %563 = vmatprep.mubr.f32.mxu0 0.0
        %564 = vmatmul.mubr.f32.gmra.mrb[0].mxu0 %v344
        %v565 = vpop.f32.mrb[0].mxu0
        %v566 = vadd.f32 %v256, %v565
        %v567 = vpop.f32.mrb[0].mxu0
        %568 = vmatprep.mubr.f32.mxu0 0.0
        %569 = vmatmul.mubr.f32.gmra.mrb[0].mxu0 %v347
        %v570 = vpop.f32.mrb[0].mxu0
        %v571 = vadd.f32 %v256, %v570
        %v572 = vpop.f32.mrb[0].mxu0
        %573 = vmatprep.mubr.f32.mxu0 0.0
        %574 = vmatmul.mubr.f32.gmra.mrb[0].mxu0 %v350
        %v575 = vpop.f32.mrb[0].mxu0
        %v576 = vadd.f32 %v256, %v575
        %v577 = vpop.f32.mrb[0].mxu0
        %578 = vmatprep.mubr.f32.mxu0 0.0
        %579 = vmatmul.mubr.f32.gmra.mrb[0].mxu0 %v353
        %v580 = vpop.f32.mrb[0].mxu0
        %v581 = vadd.f32 %v256, %v580
        %v582 = vpop.f32.mrb[0].mxu0
        %583 = vdwg.mxu0
        %v584 = vmax.f32 %v426, 0.0
        %v585 = vmax.f32 %v431, 0.0
        %v586 = vmax.f32 %v436, 0.0
        %v587 = vmax.f32 %v441, 0.0
        %v588 = vmax.f32 %v446, 0.0
        %v589 = vmax.f32 %v451, 0.0
        %v590 = vmax.f32 %v456, 0.0
        %v591 = vmax.f32 %v461, 0.0
        %v592 = vmax.f32 %v466, 0.0
        %v593 = vmax.f32 %v471, 0.0
        %v594 = vmax.f32 %v476, 0.0
        %v595 = vmax.f32 %v481, 0.0
        %v596 = vmax.f32 %v486, 0.0
        %v597 = vmax.f32 %v491, 0.0
        %v598 = vmax.f32 %v496, 0.0
        %v599 = vmax.f32 %v501, 0.0
        %v600 = vmax.f32 %v506, 0.0
        %v601 = vmax.f32 %v511, 0.0
        %v602 = vmax.f32 %v516, 0.0
        %v603 = vmax.f32 %v521, 0.0
        %v604 = vmax.f32 %v526, 0.0
        %v605 = vmax.f32 %v531, 0.0
        %v606 = vmax.f32 %v536, 0.0
        %v607 = vmax.f32 %v541, 0.0
        %v608 = vmax.f32 %v546, 0.0
        %v609 = vmax.f32 %v551, 0.0
        %v610 = vmax.f32 %v556, 0.0
        %v611 = vmax.f32 %v561, 0.0
        %v612 = vmax.f32 %v566, 0.0
        %v613 = vmax.f32 %v571, 0.0
        %v614 = vmax.f32 %v576, 0.0
        %v615 = vmax.f32 %v581, 0.0
        %616 = vst [vmem:[%s201] sm:$0xff] %v584
        %617 = vst [vmem:[%s201 + $0x8] sm:$0xff] %v585
        %618 = vst [vmem:[%s201 + $0x10] sm:$0xff] %v586
        %619 = vst [vmem:[%s201 + $0x18] sm:$0xff] %v587
        %620 = vst [vmem:[%s201 + $0x20] sm:$0xff] %v588
        %621 = vst [vmem:[%s201 + $0x28] sm:$0xff] %v589
        %622 = vst [vmem:[%s201 + $0x30] sm:$0xff] %v590
        %623 = vst [vmem:[%s201 + $0x38] sm:$0xff] %v591
        %624 = vst [vmem:[%s201 + $0x40] sm:$0xff] %v592
        %625 = vst [vmem:[%s201 + $0x48] sm:$0xff] %v593
        %626 = vst [vmem:[%s201 + $0x50] sm:$0xff] %v594
        %627 = vst [vmem:[%s201 + $0x58] sm:$0xff] %v595
        %628 = vst [vmem:[%s201 + $0x60] sm:$0xff] %v596
        %629 = vst [vmem:[%s201 + $0x68] sm:$0xff] %v597
        %630 = vst [vmem:[%s201 + $0x70] sm:$0xff] %v598
        %631 = vst [vmem:[%s201 + $0x78] sm:$0xff] %v599
        %632 = vst [vmem:[%s201 + $0x80] sm:$0xff] %v600
        %633 = vst [vmem:[%s201 + $0x88] sm:$0xff] %v601
        %634 = vst [vmem:[%s201 + $0x90] sm:$0xff] %v602
        %635 = vst [vmem:[%s201 + $0x98] sm:$0xff] %v603
        %636 = vst [vmem:[%s201 + $0xa0] sm:$0xff] %v604
        %637 = vst [vmem:[%s201 + $0xa8] sm:$0xff] %v605
        %638 = vst [vmem:[%s201 + $0xb0] sm:$0xff] %v606
        %639 = vst [vmem:[%s201 + $0xb8] sm:$0xff] %v607
        %640 = vst [vmem:[%s201 + $0xc0] sm:$0xff] %v608
        %641 = vst [vmem:[%s201 + $0xc8] sm:$0xff] %v609
        %642 = vst [vmem:[%s201 + $0xd0] sm:$0xff] %v610
        %643 = vst [vmem:[%s201 + $0xd8] sm:$0xff] %v611
        %644 = vst [vmem:[%s201 + $0xe0] sm:$0xff] %v612
        %645 = vst [vmem:[%s201 + $0xe8] sm:$0xff] %v613
        %646 = vst [vmem:[%s201 + $0xf0] sm:$0xff] %v614
        %647 = vst [vmem:[%s201 + $0xf8] sm:$0xff] %v615
        %s648 = sand.u32 %s117, 1
        %s649 = scalar_lea.sflag [#allocation3], %s648
        %s650 = sand.u32 %s117, 1
        %s651 = smul.addr %s650, 256
        %s652 = scalar_lea.vmem [#allocation2], %s651
        // Predicated region
        $region33: #{tpu_custom_call.1} parent=31 // pred_check
          %p653 = pneg %p127
        $region34: #{tpu_custom_call.1} parent=31 // pred_check_branch
          %655 = sbr.rel (%p653) target = $region36
        $region35: #{tpu_custom_call.1} parent=31 // pred_region
          %s657 = ssub.s32 4096, 4096
          %658 = vsyncadd %s649, %s657
          %s659 = smul.addr %s22, 32
          %s660 = sadd.s32 %s21, %s659
          %s661 = smul.addr %s660, 128
          %s662 = scalar_lea.hbm %s3, %s661
          %s663 = sshll.u32 %s652, 4
          %s664 = int_to_ptr.vmem [resolvable:$true] %s663
          %669 = dma.vmem_to_hbm [thread:$0]  %s664, 4096, %s662, %s649, 128, 128, 8
        $region36: #{tpu_custom_call.1} parent=31 // pred_fallthru
          _
      $region32: #{tpu_custom_call.1} parent=5 // pred_fallthru
        _
      %p670 = scmp.le.s32.totalorder 2, %s12
      // Predicated region
      $region37: #{tpu_custom_call.1} parent=5 // pred_check
        %p671 = pneg %p670
      $region38: #{tpu_custom_call.1} parent=5 // pred_check_branch
        %673 = sbr.rel (%p671) target = $region40
      $region39: #{tpu_custom_call.1} parent=5 // pred_region
        %s674 = ssub.s32 %s12, 2
        // Predicated region
        $region41: #{tpu_custom_call.1} parent=39 // pred_check
          %p675 = pneg %p133
        $region42: #{tpu_custom_call.1} parent=39 // pred_check_branch
          %677 = sbr.rel (%p675) target = $region44
        $region43: #{tpu_custom_call.1} parent=39 // pred_region
          %s678 = sand.u32 %s118, 1
          %s679 = scalar_lea.sflag [#allocation3], %s678
          %s680 = sand.u32 %s118, 1
          %s681 = smul.addr %s680, 256
          %s682 = scalar_lea.vmem [#allocation2], %s681
          %683 = dma.done %s679, 4096
        $region44: #{tpu_custom_call.1} parent=39 // pred_fallthru
          _
      $region40: #{tpu_custom_call.1} parent=5 // pred_fallthru
        _
    $region6: #{tpu_custom_call.1} parent=1 // loop_footer
      %s16 = sadd.s32 1, %s12
    $region7: #{tpu_custom_call.1} parent=1 // loop_footer_branch
      %11 = sbr.rel target = $region3
    $region8: #{tpu_custom_call.1} parent=1 // loop_exit
      _
    %684 = vsyncpa [#allocation3], 1
    %s685 = scalar_lea.sflag [#allocation3], 1
    %686 = vsyncpa %s685, 1

</llo_original>
